<compile_context>
chip_gen: v7x
topology: tpu7x:2x2x1
jax: 0.10.0
libtpu: 0.0.40
codegen_flags: <defaults>
</compile_context>

<pallas_src>
import functools
import math

import jax
import jax.numpy as jnp
from jax.experimental import pallas as pl
from jax.experimental.pallas import tpu as pltpu


def _round_up(x, m):
    return (x + m - 1) // m * m


def _gcn_adj_first_kernel(adj_ref, x_ref, w_ref, o_ref, acc_ref, *, negative_slope):
    """Row tile i, contraction block k:
         acc[i] += adj[i, k] @ x[k]            (f32 accumulation on the MXU)
       finalize (k == last):
         o[i] = leaky_relu(acc[i] @ W)         (W kept f32 -> no downcast of the f32 acc)
    Summed over row tiles the finalize @W equals exactly one full x @ W (no recompute)."""
    k = pl.program_id(1)

    @pl.when(k == 0)
    def _init():
        acc_ref[...] = jnp.zeros_like(acc_ref)

    acc_ref[...] += jnp.dot(adj_ref[...], x_ref[...],
                            preferred_element_type=jnp.float32)

    @pl.when(k == pl.num_programs(1) - 1)
    def _finalize():
        out = jnp.dot(acc_ref[...], w_ref[...], preferred_element_type=jnp.float32)
        out = jnp.where(out >= 0, out, negative_slope * out)   # LeakyReLU(0.2)
        o_ref[...] = out.astype(o_ref.dtype)                   # Dropout(eval) = identity


def _gcn_support_first_kernel(adj_ref, s_ref, o_ref, acc_ref, *, negative_slope):
    """support = x @ W is precomputed ONCE in the wrapper (hoisted per review);
       kernel streams acc[i] += adj[i, k] @ support[k]; finalize applies LeakyReLU."""
    k = pl.program_id(1)

    @pl.when(k == 0)
    def _init():
        acc_ref[...] = jnp.zeros_like(acc_ref)

    acc_ref[...] += jnp.dot(adj_ref[...], s_ref[...],
                            preferred_element_type=jnp.float32)

    @pl.when(k == pl.num_programs(1) - 1)
    def _finalize():
        out = acc_ref[...]
        out = jnp.where(out >= 0, out, negative_slope * out)   # LeakyReLU(0.2)
        o_ref[...] = out.astype(o_ref.dtype)                   # Dropout(eval) = identity


def _vmem_ceiling_bytes():
    """Generation-aware scoped-VMEM ceiling: leave headroom below physical VMEM."""
    cap = 64 << 20  # conservative fallback (v7x per-core VMEM)
    try:
        cap = int(pltpu.get_tpu_info().vmem_capacity_bytes)
    except Exception:
        pass
    if cap <= (64 << 20):                       # v7x-class: 64 MiB physical
        return max(cap - (16 << 20), 32 << 20)  # ~48 MiB, headroom for compiler scratch
    return min(cap - (24 << 20), 100 << 20)     # v5e/v6e: 128 MiB physical -> ~100 MiB


def _choose_tiles(n_pad, rhs_width, out_w, acc_w, adj_isz, rhs_isz, out_isz,
                  w_bytes, budget_bytes):
    """Pick (tm, tk): multiples of 128 dividing n_pad.  tk favors big DMA tiles;
    tm is as large as the VMEM budget allows while keeping >= 2 row tiles when
    n_pad permits (so the 'parallel' row axis can split across v7x's 2 TCs)."""
    tk = next(t for t in (512, 256, 128) if n_pad % t == 0)
    candidates = [t for t in (1024, 512, 256, 128) if n_pad % t == 0]
    tm = candidates[-1]  # 128 always divides (n_pad is a multiple of 128)
    for t in candidates:
        if n_pad >= 256 and n_pad // t < 2:
            continue  # keep >= 2 row tiles for megacore
        need = (2 * t * tk * adj_isz            # adj, double-buffered
                + 2 * tk * rhs_width * rhs_isz  # rhs (x or support), double-buffered
                + 2 * t * out_w * out_isz       # out, double-buffered
                + t * acc_w * 4                 # f32 accumulator scratch
                + w_bytes)                      # single-buffered W (adj-first only)
        if need <= budget_bytes:
            tm = t
            break
    return tm, tk


def graph_convolution(x, adj, weight, *, negative_slope=0.2,
                      operand_dtype=jnp.bfloat16, tm=None, tk=None):
    """GraphConvolution forward: dropout(leaky_relu(adj @ (x @ weight))), bias=False,
    eval-mode dropout (identity).

    x: (N, in_f), adj: (N, N), weight: (in_f, out_f) -> (N, out_f).

    operand_dtype is the HBM storage dtype of adj / x (or the precomputed support):
    bf16 (default) halves the dominant adj DMA traffic with f32 MXU accumulation;
    pass jnp.float32 for bit-tight numerics.
    """
    n, in_f = x.shape
    in_f_w, out_f = weight.shape
    assert adj.shape == (n, n)
    assert in_f_w == in_f

    out_dtype = x.dtype
    operand_dtype = jnp.dtype(operand_dtype)
    op_isz = operand_dtype.itemsize
    out_isz = jnp.dtype(out_dtype).itemsize

    # Lane-dense padding: feature dims and N padded to multiples of 128.
    in_f_pad = _round_up(in_f, 128)
    out_f_pad = _round_up(out_f, 128)
    n_pad0 = _round_up(n, 128)

    # Matmul-order choice: put the smaller width on the N^2-sized contraction.
    adj_first = in_f_pad <= out_f_pad
    rhs_width = in_f_pad if adj_first else out_f_pad
    acc_width = rhs_width
    w_bytes = in_f_pad * out_f_pad * 4 if adj_first else 0

    ceiling = _vmem_ceiling_bytes()
    budget = ceiling - (8 << 20)

    auto_tm, auto_tk = _choose_tiles(n_pad0, rhs_width, out_f_pad, acc_width,
                                     op_isz, op_isz, out_isz, w_bytes, budget)
    tm = auto_tm if tm is None else min(max(128, _round_up(int(tm), 128)), n_pad0)
    tk = auto_tk if tk is None else min(max(128, _round_up(int(tk), 128)), n_pad0)
    n_pad = _round_up(n, math.lcm(tm, tk))

    # Pad + cast in HBM (outside the kernel) so the dominant adj DMA already moves
    # operand_dtype bytes.  W stays f32: the finalize matmul's LHS is the f32
    # accumulator, so accuracy is not compounded by a second downcast.
    adj_p = jnp.pad(adj, ((0, n_pad - n), (0, n_pad - n))).astype(operand_dtype)
    if adj_first:
        rhs = jnp.pad(x, ((0, n_pad - n), (0, in_f_pad - in_f))).astype(operand_dtype)
        w_p = jnp.pad(weight, ((0, in_f_pad - in_f),
                               (0, out_f_pad - out_f))).astype(jnp.float32)
    else:
        # Hoisted: support = x @ W computed exactly once (plain XLA matmul, tiny vs N^2).
        support = jnp.dot(x, weight, preferred_element_type=jnp.float32)
        rhs = jnp.pad(support, ((0, n_pad - n),
                                (0, out_f_pad - out_f))).astype(operand_dtype)

    grid = (n_pad // tm, n_pad // tk)

    vmem_need = (2 * tm * tk * op_isz + 2 * tk * rhs_width * op_isz
                 + 2 * tm * out_f_pad * out_isz + tm * acc_width * 4 + w_bytes)
    vmem_limit = int(min(max(vmem_need + (8 << 20), 32 << 20), ceiling))

    flops = 2 * n_pad * n_pad * rhs_width
    if adj_first:
        flops += 2 * n_pad * in_f_pad * out_f_pad
    bytes_accessed = (n_pad * n_pad * op_isz                    # adj, streamed once
                      + grid[0] * n_pad * rhs_width * op_isz    # rhs, refetched per row tile
                      + n_pad * out_f_pad * out_isz + w_bytes)
    cost = pl.CostEstimate(flops=flops, transcendentals=0,
                           bytes_accessed=bytes_accessed)

    adj_spec = pl.BlockSpec((tm, tk), lambda i, k: (i, k))          # adj streamed tiles
    rhs_spec = pl.BlockSpec((tk, rhs_width), lambda i, k: (k, 0))   # x / support per k-block
    out_spec = pl.BlockSpec((tm, out_f_pad), lambda i, k: (i, 0))   # lane-dense output slab

    if adj_first:
        kernel = functools.partial(_gcn_adj_first_kernel,
                                   negative_slope=negative_slope)
        # Constant block index across the whole grid -> single buffer reclaims VMEM.
        w_spec = pl.BlockSpec((in_f_pad, out_f_pad), lambda i, k: (0, 0),
                              pipeline_mode=pl.Buffered(1))
        in_specs = [adj_spec, rhs_spec, w_spec]
        operands = (adj_p, rhs, w_p)
    else:
        kernel = functools.partial(_gcn_support_first_kernel,
                                   negative_slope=negative_slope)
        in_specs = [adj_spec, rhs_spec]
        operands = (adj_p, rhs)

    out = pl.pallas_call(
        kernel,
        out_shape=jax.ShapeDtypeStruct((n_pad, out_f_pad), out_dtype),
        grid=grid,
        in_specs=in_specs,
        out_specs=out_spec,
        scratch_shapes=[pltpu.VMEM((tm, acc_width), jnp.float32)],
        compiler_params=pltpu.CompilerParams(
            dimension_semantics=("parallel", "arbitrary"),  # rows megacore-splittable
            vmem_limit_bytes=vmem_limit,
        ),
        cost_estimate=cost,
    )(*operands)

    return out[:n, :out_f]


def reference(x, adj, weight, negative_slope=0.2):
    support = x @ weight
    out = adj @ support
    return jnp.where(out >= 0, out, negative_slope * out)


if __name__ == "__main__":
    # Shapes consistent with the module; N deliberately not a multiple of 128 so the
    # padding + multi-tile paths are exercised.
    N, IN_F, OUT_F = 200, 32, 16

    key = jax.random.PRNGKey(0)
    kx, kadj, kw = jax.random.split(key, 3)

    x = jax.random.normal(kx, (N, IN_F), dtype=jnp.float32)
    adj = jax.random.uniform(kadj, (N, N), dtype=jnp.float32)
    # reset_parameters(): weight ~ U(-stdv, stdv), stdv = 1/sqrt(out_features)
    stdv = 1.0 / math.sqrt(OUT_F)
    weight = jax.random.uniform(kw, (IN_F, OUT_F), minval=-stdv, maxval=stdv,
                                dtype=jnp.float32)
    ref = reference(x, adj, weight)

    # 1) f32 operands, forced multi-block contraction (n_pad=256, tm=tk=128 ->
    #    grid (2, 2)): tight numerical check of the accumulate/finalize path.
    out_f32 = jax.block_until_ready(
        graph_convolution(x, adj, weight, operand_dtype=jnp.float32, tm=128, tk=128))
    assert out_f32.shape == (N, OUT_F)
    err = float(jnp.max(jnp.abs(out_f32 - ref)))
    assert jnp.allclose(out_f32, ref, atol=1e-3, rtol=1e-3), f"f32 mismatch {err}"

    # 2) default bf16 operands (adj/x stored bf16 in HBM -> half the dominant DMA
    #    traffic; f32 accumulation): quantization-level tolerance.
    out_bf16 = jax.block_until_ready(graph_convolution(x, adj, weight))
    scale = max(float(jnp.max(jnp.abs(ref))), 1.0)
    err = float(jnp.max(jnp.abs(out_bf16 - ref)))
    assert jnp.allclose(out_bf16, ref, atol=5e-2 * scale, rtol=5e-2), f"bf16 mismatch {err}"

    # 3) support-first path (in_features > padded out_features): x @ W hoisted to a
    #    single wrapper matmul, kernel streams adj @ support.
    IN_F2 = 300
    x2 = jax.random.normal(kx, (N, IN_F2), dtype=jnp.float32)
    w2 = jax.random.uniform(kw, (IN_F2, OUT_F), minval=-stdv, maxval=stdv,
                            dtype=jnp.float32)
    ref2 = reference(x2, adj, w2)
    out2 = jax.block_until_ready(
        graph_convolution(x2, adj, w2, operand_dtype=jnp.float32))
    err2 = float(jnp.max(jnp.abs(out2 - ref2)))
    assert jnp.allclose(out2, ref2, atol=1e-3, rtol=1e-3), f"support-first mismatch {err2}"

    print("KERNEL_OK")
</pallas_src>

<mosaic_0001>
module attributes {stable_mosaic.version = 11 : i64} {
  func.func @_gcn_adj_first_kernel(%arg0: i32, %arg1: i32, %arg2: memref<128x128xf32, #tpu.memory_space<vmem>>, %arg3: memref<128x128xf32, #tpu.memory_space<vmem>>, %arg4: memref<128x128xf32, #tpu.memory_space<vmem>>, %arg5: memref<128x128xf32, #tpu.memory_space<vmem>>, %arg6: memref<128x128xf32, #tpu.memory_space<vmem>>) attributes {dimension_semantics = [#tpu.dimension_semantics<parallel>, #tpu.dimension_semantics<arbitrary>], iteration_bounds = array<i64: 2, 2>, scalar_prefetch = 0 : i64, scratch_operands = 1 : i64, tpu.core_type = #tpu.core_type<tc>, window_params = [{transform_indices = @transform_0, window_bounds = array<i64: 128, 128>}, {transform_indices = @transform_1, window_bounds = array<i64: 128, 128>}, {pipeline_mode = #tpu.pipeline_mode<synchronous>, transform_indices = @transform_2, window_bounds = array<i64: 128, 128>}, {transform_indices = @transform_3, window_bounds = array<i64: 128, 128>}]} {
    %c0_i32 = arith.constant 0 : i32
    %0 = arith.cmpi eq, %arg1, %c0_i32 : i32
    %1 = arith.extui %0 : i1 to i32
    %c0_i32_0 = arith.constant 0 : i32
    %2 = arith.cmpi ne, %1, %c0_i32_0 : i32
    scf.if %2 {
      %cst_9 = arith.constant 0.000000e+00 : f32
      %12 = vector.broadcast %cst_9 : f32 to vector<128x128xf32>
      %c0_10 = arith.constant 0 : index
      %c0_11 = arith.constant 0 : index
      %13 = vector.load %arg6[%c0_10, %c0_11] : memref<128x128xf32, #tpu.memory_space<vmem>>, vector<128x128xf32>
      tpu.vector_store %arg6[%c0_10, %c0_11], %12 {strides = array<i32>} : memref<128x128xf32, #tpu.memory_space<vmem>>, vector<128x128xf32>,
    } else {
    }
    %c0 = arith.constant 0 : index
    %c0_1 = arith.constant 0 : index
    %3 = vector.load %arg6[%c0, %c0_1] : memref<128x128xf32, #tpu.memory_space<vmem>>, vector<128x128xf32>
    %c0_2 = arith.constant 0 : index
    %c0_3 = arith.constant 0 : index
    %4 = vector.load %arg2[%c0_2, %c0_3] : memref<128x128xf32, #tpu.memory_space<vmem>>, vector<128x128xf32>
    %c0_4 = arith.constant 0 : index
    %c0_5 = arith.constant 0 : index
    %5 = vector.load %arg3[%c0_4, %c0_5] : memref<128x128xf32, #tpu.memory_space<vmem>>, vector<128x128xf32>
    %cst = arith.constant dense<0.000000e+00> : vector<128x128xf32>
    %6 = tpu.matmul %4, %5, %cst {dimension_numbers = #tpu.dot_dimension_numbers<[1], [0], [0], [1], [0, 0, 1, 1], [], []>} : vector<128x128xf32>, vector<128x128xf32>, vector<128x128xf32> -> vector<128x128xf32>
    %7 = arith.addf %3, %6 : vector<128x128xf32>
    %c0_6 = arith.constant 0 : index
    %c0_7 = arith.constant 0 : index
    %8 = vector.load %arg6[%c0_6, %c0_7] : memref<128x128xf32, #tpu.memory_space<vmem>>, vector<128x128xf32>
    tpu.vector_store %arg6[%c0_6, %c0_7], %7 {strides = array<i32>} : memref<128x128xf32, #tpu.memory_space<vmem>>, vector<128x128xf32>,
    %c1_i32 = arith.constant 1 : i32
    %9 = arith.cmpi eq, %arg1, %c1_i32 : i32
    %10 = arith.extui %9 : i1 to i32
    %c0_i32_8 = arith.constant 0 : i32
    %11 = arith.cmpi ne, %10, %c0_i32_8 : i32
    scf.if %11 {
      %c0_9 = arith.constant 0 : index
      %c0_10 = arith.constant 0 : index
      %12 = vector.load %arg6[%c0_9, %c0_10] : memref<128x128xf32, #tpu.memory_space<vmem>>, vector<128x128xf32>
      %c0_11 = arith.constant 0 : index
      %c0_12 = arith.constant 0 : index
      %13 = vector.load %arg4[%c0_11, %c0_12] : memref<128x128xf32, #tpu.memory_space<vmem>>, vector<128x128xf32>
      %cst_13 = arith.constant dense<0.000000e+00> : vector<128x128xf32>
      %14 = tpu.matmul %12, %13, %cst_13 {dimension_numbers = #tpu.dot_dimension_numbers<[1], [0], [0], [1], [0, 0, 1, 1], [], []>} : vector<128x128xf32>, vector<128x128xf32>, vector<128x128xf32> -> vector<128x128xf32>
      %cst_14 = arith.constant 0.000000e+00 : f32
      %15 = vector.broadcast %cst_14 : f32 to vector<128x128xf32>
      %16 = arith.cmpf oge, %14, %15 : vector<128x128xf32>
      %cst_15 = arith.constant 2.000000e-01 : f32
      %17 = vector.broadcast %cst_15 : f32 to vector<128x128xf32>
      %18 = arith.mulf %17, %14 : vector<128x128xf32>
      %19 = arith.select %16, %14, %18 : vector<128x128xi1>, vector<128x128xf32>
      %c0_16 = arith.constant 0 : index
      %c0_17 = arith.constant 0 : index
      %20 = vector.load %arg5[%c0_16, %c0_17] : memref<128x128xf32, #tpu.memory_space<vmem>>, vector<128x128xf32>
      tpu.vector_store %arg5[%c0_16, %c0_17], %19 {strides = array<i32>} : memref<128x128xf32, #tpu.memory_space<vmem>>, vector<128x128xf32>,
    } else {
    }
    return
  }
  func.func @transform_0(%arg0: i32, %arg1: i32) -> (i32, i32) {
    %c0_i32 = arith.constant 0 : i32
    return %arg0, %arg1 : i32, i32
  }
  func.func @transform_1(%arg0: i32, %arg1: i32) -> (i32, i32) {
    %c0_i32 = arith.constant 0 : i32
    %c0_i32_0 = arith.constant 0 : i32
    return %arg1, %c0_i32 : i32, i32
  }
  func.func @transform_2(%arg0: i32, %arg1: i32) -> (i32, i32) {
    %c0_i32 = arith.constant 0 : i32
    %c0_i32_0 = arith.constant 0 : i32
    %c0_i32_1 = arith.constant 0 : i32
    return %c0_i32, %c0_i32_0 : i32, i32
  }
  func.func @transform_3(%arg0: i32, %arg1: i32) -> (i32, i32) {
    %c0_i32 = arith.constant 0 : i32
    %c0_i32_0 = arith.constant 0 : i32
    return %arg0, %c0_i32 : i32, i32
  }
}

</mosaic_0001>

<llo_original>
// kernel: tpu_custom_call.1
$region0: #{tpu_custom_call.1}
  #allocation0 [shape = 'u32[]', space=smem, size = 0x4, offset = 0x4, fixed_abs, tag = 'smem constant byte address 0x4 - core index']
  #allocation1 [shape = 'u32[144,128]{1,0:T(1,128)}', space=vmem, size = 0x12000, scoped, tag = 'internal scratch']
  #allocation2 [shape = 'f32[128,128]{1,0:T(8,128)}', space=vmem, size = 0x10000, scoped, tag = 'scratch operand']
  %s0 = inlined_call_operand.hbm [shape: f32[256,256], index: 0, kind: input, shape index: {}]
  %s1 = inlined_call_operand.hbm [shape: f32[256,128], index: 1, kind: input, shape index: {}]
  %s2 = inlined_call_operand.hbm [shape: f32[128,128], index: 2, kind: input, shape index: {}]
  %s3 = inlined_call_operand.hbm [shape: f32[256,128], index: 3, kind: output, shape index: {}]
  %s4 = sld [smem:[#allocation0]]
  $region65: #{tpu_custom_call.1} parent=0
    _
  %s6 = ssub.s32 1, %s4
  %s7 = scalar_select 0, %s6, %s4
  $region1: #{tpu_custom_call.1} parent=0
    #allocation3 [shape = 'u8[131072]{0}', space=vmem, size = 0x20000, scoped, tag = 'input window, operand 0']
    #allocation4 [shape = 's32[2]{0}', space=sflag, size = 0x8, scoped, tag = 'scoped memory for tpu_custom_call.1']
    #allocation5 [shape = 's32[2]{0}', space=sflag, size = 0x8, scoped, tag = 'scoped memory for tpu_custom_call.1']
    #allocation6 [shape = 'u8[131072]{0}', space=vmem, size = 0x20000, scoped, tag = 'input window, operand 1']
    #allocation7 [shape = 's32[2]{0}', space=sflag, size = 0x8, scoped, tag = 'scoped memory for tpu_custom_call.1']
    #allocation8 [shape = 'u8[65536]{0}', space=vmem, size = 0x10000, scoped, tag = 'input window, operand 2, single buffered']
    #allocation9 [shape = 'u8[131072]{0}', space=vmem, size = 0x20000, scoped, tag = 'output window, operand 0']
    %8 = vsyncpa [#allocation4], 0
    %s9 = scalar_lea.sflag [#allocation4], 1
    %10 = vsyncpa %s9, 0
    %11 = vsyncpa [#allocation7], 0
    %s12 = scalar_lea.sflag [#allocation7], 1
    %13 = vsyncpa %s12, 0
    %14 = vsyncpa [#allocation5], 0
    %s15 = scalar_lea.sflag [#allocation5], 1
    %16 = vsyncpa %s15, 0
    loop: start=0, step=1, limit=6
    $region2: #{tpu_custom_call.1} parent=1 // loop_pre_header
      _
    $region3: #{tpu_custom_call.1} parent=1 // loop_header
      %s18 = sphi 0, %s22
      %p19 = scmp.ge.s32.totalorder %s18, 6
      %s25 = sphi 0, %s37
      %s26 = sphi 0, %s33
      %s27 = sphi 0, %s25
      %s28 = sphi 0, %s26
      %s29 = sphi 0, %s27
      %s30 = sphi 0, %s28
      %s42 = sphi 0, %s44
      %s45 = sphi 0, %s42
      %s46 = sphi 0, %s45
      %s62 = sphi 0, %s46
      %s68 = sphi 0, %s70
      %s71 = sphi 0, %s68
      %s72 = sphi 0, %s71
      %s88 = sphi 0, %s72
      %s92 = sphi 0, %s92
      %s94 = sphi 0, %s92
      %s95 = sphi 0, %s94
      %s109 = sphi 0, %s95
      %s115 = sphi 0, %s117
      %s118 = sphi 0, %s115
      %s119 = sphi 0, %s118
      %s135 = sphi 0, %s119
    $region4: #{tpu_custom_call.1} parent=1 // loop_header_branch
      %21 = sbr.rel (%p19) target = $region8
    $region5: #{tpu_custom_call.1} parent=1 // loop_body
      %s23 = ssub.s32 %s18, 1
      %s24 = ssub.s32 %s18, 2
      %s31 = sadd.s32 1, %s26
      %p32 = scmp.ge.s32.totalorder %s31, 2
      %s33 = scalar_select %p32, 0, %s31
      %s34 = sadd.s32 1, %s25
      %s35 = scalar_select %p32, %s34, %s25
      %p36 = scmp.ge.s32.totalorder %s35, 2
      %s37 = scalar_select %p36, 0, %s35
      %s38 = ssub.s32 %s25, %s37
      %s39 = ssub.s32 %s26, %s33
      %s40 = sor.u32 %s38, %s39
      %p41 = scmp.eq.s32.totalorder %s40, 0
      %s43 = sadd.s32 %s42, 1
      %s44 = scalar_select %p41, %s42, %s43
      %p47 = pneg %p41
      %p48 = scmp.eq.s32.totalorder %s18, 3
      %p49 = por %p47, %p48
      %p50 = scmp.ne.s32.totalorder %s42, %s45
      %p51 = scmp.eq.s32.totalorder %s18, 0
      %p52 = por %p50, %p51
      %p53 = scmp.ne.s32.totalorder %s42, %s45
      %p54 = scmp.eq.s32.totalorder %s23, 3
      %p55 = por %p53, %p54
      %p56 = scmp.ne.s32.totalorder %s45, %s46
      %p57 = scmp.eq.s32.totalorder %s23, 0
      %p58 = por %p56, %p57
      %p59 = scmp.ne.s32.totalorder %s45, %s46
      %p60 = scmp.eq.s32.totalorder %s24, 3
      %p61 = por %p59, %p60
      %p63 = scmp.ne.s32.totalorder %s46, %s62
      %p64 = scmp.eq.s32.totalorder %s24, 0
      %p65 = por %p63, %p64
      %s66 = ssub.s32 %s26, %s33
      %p67 = scmp.eq.s32.totalorder %s66, 0
      %s69 = sadd.s32 %s68, 1
      %s70 = scalar_select %p67, %s68, %s69
      %p73 = pneg %p67
      %p74 = scmp.eq.s32.totalorder %s18, 3
      %p75 = por %p73, %p74
      %p76 = scmp.ne.s32.totalorder %s68, %s71
      %p77 = scmp.eq.s32.totalorder %s18, 0
      %p78 = por %p76, %p77
      %p79 = scmp.ne.s32.totalorder %s68, %s71
      %p80 = scmp.eq.s32.totalorder %s23, 3
      %p81 = por %p79, %p80
      %p82 = scmp.ne.s32.totalorder %s71, %s72
      %p83 = scmp.eq.s32.totalorder %s23, 0
      %p84 = por %p82, %p83
      %p85 = scmp.ne.s32.totalorder %s71, %s72
      %p86 = scmp.eq.s32.totalorder %s24, 3
      %p87 = por %p85, %p86
      %p89 = scmp.ne.s32.totalorder %s72, %s88
      %p90 = scmp.eq.s32.totalorder %s24, 0
      %p91 = por %p89, %p90
      %s93 = sadd.s32 %s92, 1
      %p96 = scmp.eq.s32.totalorder %s18, 3
      %p97 = scmp.ne.s32.totalorder %s92, %s94
      %p98 = scmp.eq.s32.totalorder %s18, 0
      %p99 = por %p97, %p98
      %p100 = scmp.ne.s32.totalorder %s92, %s94
      %p101 = scmp.eq.s32.totalorder %s23, 3
      %p102 = por %p100, %p101
      %p103 = scmp.ne.s32.totalorder %s94, %s95
      %p104 = scmp.eq.s32.totalorder %s23, 0
      %p105 = por %p103, %p104
      %p106 = scmp.ne.s32.totalorder %s94, %s95
      %p107 = scmp.eq.s32.totalorder %s24, 3
      %p108 = por %p106, %p107
      %p110 = scmp.ne.s32.totalorder %s95, %s109
      %p111 = scmp.eq.s32.totalorder %s24, 0
      %p112 = por %p110, %p111
      %s113 = ssub.s32 %s25, %s37
      %p114 = scmp.eq.s32.totalorder %s113, 0
      %s116 = sadd.s32 %s115, 1
      %s117 = scalar_select %p114, %s115, %s116
      %p120 = pneg %p114
      %p121 = scmp.eq.s32.totalorder %s18, 3
      %p122 = por %p120, %p121
      %p123 = scmp.ne.s32.totalorder %s115, %s118
      %p124 = scmp.eq.s32.totalorder %s18, 0
      %p125 = por %p123, %p124
      %p126 = scmp.ne.s32.totalorder %s115, %s118
      %p127 = scmp.eq.s32.totalorder %s23, 3
      %p128 = por %p126, %p127
      %p129 = scmp.ne.s32.totalorder %s118, %s119
      %p130 = scmp.eq.s32.totalorder %s23, 0
      %p131 = por %p129, %p130
      %p132 = scmp.ne.s32.totalorder %s118, %s119
      %p133 = scmp.eq.s32.totalorder %s24, 3
      %p134 = por %p132, %p133
      %p136 = scmp.ne.s32.totalorder %s119, %s135
      %p137 = scmp.eq.s32.totalorder %s24, 0
      %p138 = por %p136, %p137
      %p139 = scmp.le.s32.totalorder 1, %s18
      %p140 = scmp.lt.s32.totalorder %s18, 5
      %p141 = pnand %p139, %p140
      %p142 = pneg %p141
      // Predicated region
      $region9: #{tpu_custom_call.1} parent=5 // pred_check
        _
      $region10: #{tpu_custom_call.1} parent=5 // pred_check_branch
        %144 = sbr.rel (%p141) target = $region12
      $region11: #{tpu_custom_call.1} parent=5 // pred_region
        %s145 = ssub.s32 %s18, 1
        // Predicated region
        $region13: #{tpu_custom_call.1} parent=11 // pred_check
          %p146 = pneg %p105
        $region14: #{tpu_custom_call.1} parent=11 // pred_check_branch
          %148 = sbr.rel (%p146) target = $region16
        $region15: #{tpu_custom_call.1} parent=11 // pred_region
          %s150 = ssub.s32 2048, 2048
          %151 = vsyncadd [#allocation7], %s150
          %s152 = sshll.u32 [#allocation8], 4
          %s153 = int_to_ptr.vmem [resolvable:$true] %s152
          %158 = dma.hbm_to_vmem [thread:$0]  %s2, 2048, %s153, [#allocation7], 128, 128, 8
        $region16: #{tpu_custom_call.1} parent=11 // pred_fallthru
          _
      $region12: #{tpu_custom_call.1} parent=5 // pred_fallthru
        _
      %p159 = scmp.lt.s32.totalorder %s18, 4
      // Predicated region
      $region17: #{tpu_custom_call.1} parent=5 // pred_check
        %p160 = pneg %p159
      $region18: #{tpu_custom_call.1} parent=5 // pred_check_branch
        %162 = sbr.rel (%p160) target = $region20
      $region19: #{tpu_custom_call.1} parent=5 // pred_region
        // Predicated region
        $region21: #{tpu_custom_call.1} parent=19 // pred_check
          %p163 = pneg %p52
        $region22: #{tpu_custom_call.1} parent=19 // pred_check_branch
          %165 = sbr.rel (%p163) target = $region24
        $region23: #{tpu_custom_call.1} parent=19 // pred_region
          %s166 = sand.u32 %s42, 1
          %s167 = scalar_lea.sflag [#allocation4], %s166
          %s168 = sand.u32 %s42, 1
          %s169 = smul.addr %s168, 128
          %s170 = scalar_lea.vmem [#allocation3], %s169
          %s171 = smul.u32 16, %s25
          %s173 = ssub.s32 2048, 2048
          %174 = vsyncadd %s167, %s173
          %s175 = smul.addr %s171, 2
          %s176 = sadd.s32 %s26, %s175
          %s177 = smul.addr %s176, 128
          %s178 = scalar_lea.hbm %s0, %s177
          %s179 = sshll.u32 %s170, 4
          %s180 = int_to_ptr.vmem [resolvable:$true] %s179
          %185 = dma.hbm_to_vmem [thread:$0]  %s178, 2048, %s180, %s167, 256, 128, 8
        $region24: #{tpu_custom_call.1} parent=19 // pred_fallthru
          _
        // Predicated region
        $region25: #{tpu_custom_call.1} parent=19 // pred_check
          %p186 = pneg %p78
        $region26: #{tpu_custom_call.1} parent=19 // pred_check_branch
          %188 = sbr.rel (%p186) target = $region28
        $region27: #{tpu_custom_call.1} parent=19 // pred_region
          %s189 = sand.u32 %s18, 1
          %s190 = scalar_lea.sflag [#allocation7], %s189
          %s191 = sand.u32 %s68, 1
          %s192 = smul.addr %s191, 128
          %s193 = scalar_lea.vmem [#allocation6], %s192
          %s194 = smul.u32 16, %s26
          %s196 = ssub.s32 2048, 2048
          %197 = vsyncadd %s190, %s196
          %s198 = smul.addr %s194, 128
          %s199 = scalar_lea.hbm %s1, %s198
          %s200 = sshll.u32 %s193, 4
          %s201 = int_to_ptr.vmem [resolvable:$true] %s200
          %206 = dma.hbm_to_vmem [thread:$0]  %s199, 2048, %s201, %s190, 128, 128, 8
        $region28: #{tpu_custom_call.1} parent=19 // pred_fallthru
          _
      $region20: #{tpu_custom_call.1} parent=5 // pred_fallthru
        _
      %p207 = scmp.le.s32.totalorder 1, %s18
      %p208 = scmp.lt.s32.totalorder %s18, 5
      %p209 = pnand %p207, %p208
      %p210 = pneg %p209
      // Predicated region
      $region29: #{tpu_custom_call.1} parent=5 // pred_check
        _
      $region30: #{tpu_custom_call.1} parent=5 // pred_check_branch
        %212 = sbr.rel (%p209) target = $region32
      $region31: #{tpu_custom_call.1} parent=5 // pred_region
        %s213 = ssub.s32 %s18, 1
        %s214 = sand.u32 %s45, 1
        %s215 = scalar_lea.sflag [#allocation4], %s214
        %s216 = sand.u32 %s45, 1
        %s217 = smul.addr %s216, 128
        %s218 = scalar_lea.vmem [#allocation3], %s217
        // Predicated region
        $region33: #{tpu_custom_call.1} parent=31 // pred_check
          %p219 = pneg %p58
        $region34: #{tpu_custom_call.1} parent=31 // pred_check_branch
          %221 = sbr.rel (%p219) target = $region36
        $region35: #{tpu_custom_call.1} parent=31 // pred_region
          %222 = dma.done %s215, 2048
        $region36: #{tpu_custom_call.1} parent=31 // pred_fallthru
          _
        %s223 = sand.u32 %s23, 1
        %s224 = scalar_lea.sflag [#allocation7], %s223
        %s225 = sand.u32 %s71, 1
        %s226 = smul.addr %s225, 128
        %s227 = scalar_lea.vmem [#allocation6], %s226
        // Predicated region
        $region37: #{tpu_custom_call.1} parent=31 // pred_check
          %p228 = pneg %p84
        $region38: #{tpu_custom_call.1} parent=31 // pred_check_branch
          %230 = sbr.rel (%p228) target = $region40
        $region39: #{tpu_custom_call.1} parent=31 // pred_region
          %231 = dma.done %s224, 2048
        $region40: #{tpu_custom_call.1} parent=31 // pred_fallthru
          _
        // Predicated region
        $region41: #{tpu_custom_call.1} parent=31 // pred_check
          %p232 = pneg %p105
        $region42: #{tpu_custom_call.1} parent=31 // pred_check_branch
          %234 = sbr.rel (%p232) target = $region44
        $region43: #{tpu_custom_call.1} parent=31 // pred_region
          %235 = dma.done [#allocation7], 2048
        $region44: #{tpu_custom_call.1} parent=31 // pred_fallthru
          _
        %s236 = sand.u32 %s45, 1
        %s237 = scalar_lea.sflag [#allocation4], %s236
        %s238 = sand.u32 %s45, 1
        %s239 = smul.addr %s238, 128
        %s240 = scalar_lea.vmem [#allocation3], %s239
        %p241 = pneg %p58
        %p242 = pneg %p55
        %s243 = sand.u32 %s23, 1
        %s244 = scalar_lea.sflag [#allocation7], %s243
        %s245 = sand.u32 %s71, 1
        %s246 = smul.addr %s245, 128
        %s247 = scalar_lea.vmem [#allocation6], %s246
        %p248 = pneg %p84
        %p249 = pneg %p81
        %p250 = pneg %p105
        %p251 = pneg %p102
        %p252 = pneg %p131
        %p253 = pneg %p128
        %s254 = sand.u32 %s118, 1
        %s255 = scalar_lea.sflag [#allocation5], %s254
        %s256 = sand.u32 %s118, 1
        %s257 = smul.addr %s256, 128
        %s258 = scalar_lea.vmem [#allocation9], %s257
        %s259 = smul.u32 16, %s27
        %s260 = smul.u32 16, %s28
        %s261 = smul.u32 16, %s27
        %p262 = scmp.eq.s32.totalorder %s28, 0
        // Predicated region
        $region45: #{tpu_custom_call.1} parent=31 // pred_check
          %p263 = pneg %p262
        $region46: #{tpu_custom_call.1} parent=31 // pred_check_branch
          %265 = sbr.rel (%p263) target = $region48
        $region47: #{tpu_custom_call.1} parent=31 // pred_region
          %266 = vst [vmem:[#allocation2] sm:$0xff] 0.0
          %267 = vst [vmem:[#allocation2 + $0x8] sm:$0xff] 0.0
          %268 = vst [vmem:[#allocation2 + $0x10] sm:$0xff] 0.0
          %269 = vst [vmem:[#allocation2 + $0x18] sm:$0xff] 0.0
          %270 = vst [vmem:[#allocation2 + $0x20] sm:$0xff] 0.0
          %271 = vst [vmem:[#allocation2 + $0x28] sm:$0xff] 0.0
          %272 = vst [vmem:[#allocation2 + $0x30] sm:$0xff] 0.0
          %273 = vst [vmem:[#allocation2 + $0x38] sm:$0xff] 0.0
          %274 = vst [vmem:[#allocation2 + $0x40] sm:$0xff] 0.0
          %275 = vst [vmem:[#allocation2 + $0x48] sm:$0xff] 0.0
          %276 = vst [vmem:[#allocation2 + $0x50] sm:$0xff] 0.0
          %277 = vst [vmem:[#allocation2 + $0x58] sm:$0xff] 0.0
          %278 = vst [vmem:[#allocation2 + $0x60] sm:$0xff] 0.0
          %279 = vst [vmem:[#allocation2 + $0x68] sm:$0xff] 0.0
          %280 = vst [vmem:[#allocation2 + $0x70] sm:$0xff] 0.0
          %281 = vst [vmem:[#allocation2 + $0x78] sm:$0xff] 0.0
        $region48: #{tpu_custom_call.1} parent=31 // pred_fallthru
          _
        %v282 = vld [vmem:[#allocation2] sm:$0xff]
        %v283 = vld [vmem:[#allocation2 + $0x8] sm:$0xff]
        %v284 = vld [vmem:[#allocation2 + $0x10] sm:$0xff]
        %v285 = vld [vmem:[#allocation2 + $0x18] sm:$0xff]
        %v286 = vld [vmem:[#allocation2 + $0x20] sm:$0xff]
        %v287 = vld [vmem:[#allocation2 + $0x28] sm:$0xff]
        %v288 = vld [vmem:[#allocation2 + $0x30] sm:$0xff]
        %v289 = vld [vmem:[#allocation2 + $0x38] sm:$0xff]
        %v290 = vld [vmem:[#allocation2 + $0x40] sm:$0xff]
        %v291 = vld [vmem:[#allocation2 + $0x48] sm:$0xff]
        %v292 = vld [vmem:[#allocation2 + $0x50] sm:$0xff]
        %v293 = vld [vmem:[#allocation2 + $0x58] sm:$0xff]
        %v294 = vld [vmem:[#allocation2 + $0x60] sm:$0xff]
        %v295 = vld [vmem:[#allocation2 + $0x68] sm:$0xff]
        %v296 = vld [vmem:[#allocation2 + $0x70] sm:$0xff]
        %v297 = vld [vmem:[#allocation2 + $0x78] sm:$0xff]
        %v298 = vld [vmem:[%s218] sm:$0xff]
        %v299 = vld [vmem:[%s218 + $0x8] sm:$0xff]
        %v300 = vld [vmem:[%s218 + $0x10] sm:$0xff]
        %v301 = vld [vmem:[%s218 + $0x18] sm:$0xff]
        %v302 = vld [vmem:[%s218 + $0x20] sm:$0xff]
        %v303 = vld [vmem:[%s218 + $0x28] sm:$0xff]
        %v304 = vld [vmem:[%s218 + $0x30] sm:$0xff]
        %v305 = vld [vmem:[%s218 + $0x38] sm:$0xff]
        %v306 = vld [vmem:[%s218 + $0x40] sm:$0xff]
        %v307 = vld [vmem:[%s218 + $0x48] sm:$0xff]
        %v308 = vld [vmem:[%s218 + $0x50] sm:$0xff]
        %v309 = vld [vmem:[%s218 + $0x58] sm:$0xff]
        %v310 = vld [vmem:[%s218 + $0x60] sm:$0xff]
        %v311 = vld [vmem:[%s218 + $0x68] sm:$0xff]
        %v312 = vld [vmem:[%s218 + $0x70] sm:$0xff]
        %v313 = vld [vmem:[%s218 + $0x78] sm:$0xff]
        %v314 = vld [vmem:[%s227] sm:$0xff]
        %v315 = vld [vmem:[%s227 + $0x8] sm:$0xff]
        %v316 = vld [vmem:[%s227 + $0x10] sm:$0xff]
        %v317 = vld [vmem:[%s227 + $0x18] sm:$0xff]
        %v318 = vld [vmem:[%s227 + $0x20] sm:$0xff]
        %v319 = vld [vmem:[%s227 + $0x28] sm:$0xff]
        %v320 = vld [vmem:[%s227 + $0x30] sm:$0xff]
        %v321 = vld [vmem:[%s227 + $0x38] sm:$0xff]
        %v322 = vld [vmem:[%s227 + $0x40] sm:$0xff]
        %v323 = vld [vmem:[%s227 + $0x48] sm:$0xff]
        %v324 = vld [vmem:[%s227 + $0x50] sm:$0xff]
        %v325 = vld [vmem:[%s227 + $0x58] sm:$0xff]
        %v326 = vld [vmem:[%s227 + $0x60] sm:$0xff]
        %v327 = vld [vmem:[%s227 + $0x68] sm:$0xff]
        %v328 = vld [vmem:[%s227 + $0x70] sm:$0xff]
        %v329 = vld [vmem:[%s227 + $0x78] sm:$0xff]
        %330 = vmatprep.subr.mxu0 0.0
        %331 = vmatpush1.msra.mxu0 %v314
        %332 = vmatprep.subr.mxu0 0.0
        %333 = vmatpush1.msra.mxu0 %v315
        %334 = vmatprep.subr.mxu0 0.0
        %335 = vmatpush1.msra.mxu0 %v316
        %336 = vmatprep.subr.mxu0 0.0
        %337 = vmatpush1.msra.mxu0 %v317
        %338 = vmatprep.subr.mxu0 0.0
        %339 = vmatpush1.msra.mxu0 %v318
        %340 = vmatprep.subr.mxu0 0.0
        %341 = vmatpush1.msra.mxu0 %v319
        %342 = vmatprep.subr.mxu0 0.0
        %343 = vmatpush1.msra.mxu0 %v320
        %344 = vmatprep.subr.mxu0 0.0
        %345 = vmatpush1.msra.mxu0 %v321
        %346 = vmatprep.subr.mxu0 0.0
        %347 = vmatpush1.msra.mxu0 %v322
        %348 = vmatprep.subr.mxu0 0.0
        %349 = vmatpush1.msra.mxu0 %v323
        %350 = vmatprep.subr.mxu0 0.0
        %351 = vmatpush1.msra.mxu0 %v324
        %352 = vmatprep.subr.mxu0 0.0
        %353 = vmatpush1.msra.mxu0 %v325
        %354 = vmatprep.subr.mxu0 0.0
        %355 = vmatpush1.msra.mxu0 %v326
        %356 = vmatprep.subr.mxu0 0.0
        %357 = vmatpush1.msra.mxu0 %v327
        %358 = vmatprep.subr.mxu0 0.0
        %359 = vmatpush1.msra.mxu0 %v328
        %360 = vmatprep.subr.mxu0 0.0
        %361 = vmatpush1.msra.mxu0 %v329
        %362 = vmatprep.subr.mxu0 0.0
        %363 = vmatpush1.msra.mxu0 0.0
        %364 = vmatprep.subr.mxu0 0.0
        %365 = vmatpush1.msra.mxu0 0.0
        %366 = vmatprep.subr.mxu0 0.0
        %367 = vmatpush1.msra.mxu0 0.0
        %368 = vmatprep.subr.mxu0 0.0
        %369 = vmatpush1.msra.mxu0 0.0
        %370 = vmatprep.subr.mxu0 0.0
        %371 = vmatpush1.msra.mxu0 0.0
        %372 = vmatprep.subr.mxu0 0.0
        %373 = vmatpush1.msra.mxu0 0.0
        %374 = vmatprep.subr.mxu0 0.0
        %375 = vmatpush1.msra.mxu0 0.0
        %376 = vmatprep.subr.mxu0 0.0
        %377 = vmatpush1.msra.mxu0 0.0
        %378 = vmatprep.subr.mxu0 0.0
        %379 = vmatpush1.msra.mxu0 0.0
        %380 = vmatprep.subr.mxu0 0.0
        %381 = vmatpush1.msra.mxu0 0.0
        %382 = vmatprep.subr.mxu0 0.0
        %383 = vmatpush1.msra.mxu0 0.0
        %384 = vmatprep.subr.mxu0 0.0
        %385 = vmatpush1.msra.mxu0 0.0
        %386 = vmatprep.subr.mxu0 0.0
        %387 = vmatpush1.msra.mxu0 0.0
        %388 = vmatprep.subr.mxu0 0.0
        %389 = vmatpush1.msra.mxu0 0.0
        %390 = vmatprep.subr.mxu0 0.0
        %391 = vmatpush1.msra.mxu0 0.0
        %392 = vmatprep.subr.mxu0 0.0
        %393 = vmatpush1.msra.mxu0 0.0
        %394 = vmatprep.mubr.f32.mxu0 0.0
        %395 = vmatmul.mubr.f32.gmra.mrb[0].mxu0 %v298
        %v396 = vpop.f32.mrb[0].mxu0
        %v397 = vadd.f32 0.0, %v396
        %v398 = vpop.f32.mrb[0].mxu0
        %399 = vmatprep.mubr.f32.mxu0 0.0
        %400 = vmatmul.mubr.f32.gmra.mrb[0].mxu0 %v299
        %v401 = vpop.f32.mrb[0].mxu0
        %v402 = vadd.f32 0.0, %v401
        %v403 = vpop.f32.mrb[0].mxu0
        %404 = vmatprep.mubr.f32.mxu0 0.0
        %405 = vmatmul.mubr.f32.gmra.mrb[0].mxu0 %v300
        %v406 = vpop.f32.mrb[0].mxu0
        %v407 = vadd.f32 0.0, %v406
        %v408 = vpop.f32.mrb[0].mxu0
        %409 = vmatprep.mubr.f32.mxu0 0.0
        %410 = vmatmul.mubr.f32.gmra.mrb[0].mxu0 %v301
        %v411 = vpop.f32.mrb[0].mxu0
        %v412 = vadd.f32 0.0, %v411
        %v413 = vpop.f32.mrb[0].mxu0
        %414 = vmatprep.mubr.f32.mxu0 0.0
        %415 = vmatmul.mubr.f32.gmra.mrb[0].mxu0 %v302
        %v416 = vpop.f32.mrb[0].mxu0
        %v417 = vadd.f32 0.0, %v416
        %v418 = vpop.f32.mrb[0].mxu0
        %419 = vmatprep.mubr.f32.mxu0 0.0
        %420 = vmatmul.mubr.f32.gmra.mrb[0].mxu0 %v303
        %v421 = vpop.f32.mrb[0].mxu0
        %v422 = vadd.f32 0.0, %v421
        %v423 = vpop.f32.mrb[0].mxu0
        %424 = vmatprep.mubr.f32.mxu0 0.0
        %425 = vmatmul.mubr.f32.gmra.mrb[0].mxu0 %v304
        %v426 = vpop.f32.mrb[0].mxu0
        %v427 = vadd.f32 0.0, %v426
        %v428 = vpop.f32.mrb[0].mxu0
        %429 = vmatprep.mubr.f32.mxu0 0.0
        %430 = vmatmul.mubr.f32.gmra.mrb[0].mxu0 %v305
        %v431 = vpop.f32.mrb[0].mxu0
        %v432 = vadd.f32 0.0, %v431
        %v433 = vpop.f32.mrb[0].mxu0
        %434 = vmatprep.mubr.f32.mxu0 0.0
        %435 = vmatmul.mubr.f32.gmra.mrb[0].mxu0 %v306
        %v436 = vpop.f32.mrb[0].mxu0
        %v437 = vadd.f32 0.0, %v436
        %v438 = vpop.f32.mrb[0].mxu0
        %439 = vmatprep.mubr.f32.mxu0 0.0
        %440 = vmatmul.mubr.f32.gmra.mrb[0].mxu0 %v307
        %v441 = vpop.f32.mrb[0].mxu0
        %v442 = vadd.f32 0.0, %v441
        %v443 = vpop.f32.mrb[0].mxu0
        %444 = vmatprep.mubr.f32.mxu0 0.0
        %445 = vmatmul.mubr.f32.gmra.mrb[0].mxu0 %v308
        %v446 = vpop.f32.mrb[0].mxu0
        %v447 = vadd.f32 0.0, %v446
        %v448 = vpop.f32.mrb[0].mxu0
        %449 = vmatprep.mubr.f32.mxu0 0.0
        %450 = vmatmul.mubr.f32.gmra.mrb[0].mxu0 %v309
        %v451 = vpop.f32.mrb[0].mxu0
        %v452 = vadd.f32 0.0, %v451
        %v453 = vpop.f32.mrb[0].mxu0
        %454 = vmatprep.mubr.f32.mxu0 0.0
        %455 = vmatmul.mubr.f32.gmra.mrb[0].mxu0 %v310
        %v456 = vpop.f32.mrb[0].mxu0
        %v457 = vadd.f32 0.0, %v456
        %v458 = vpop.f32.mrb[0].mxu0
        %459 = vmatprep.mubr.f32.mxu0 0.0
        %460 = vmatmul.mubr.f32.gmra.mrb[0].mxu0 %v311
        %v461 = vpop.f32.mrb[0].mxu0
        %v462 = vadd.f32 0.0, %v461
        %v463 = vpop.f32.mrb[0].mxu0
        %464 = vmatprep.mubr.f32.mxu0 0.0
        %465 = vmatmul.mubr.f32.gmra.mrb[0].mxu0 %v312
        %v466 = vpop.f32.mrb[0].mxu0
        %v467 = vadd.f32 0.0, %v466
        %v468 = vpop.f32.mrb[0].mxu0
        %469 = vmatprep.mubr.f32.mxu0 0.0
        %470 = vmatmul.mubr.f32.gmra.mrb[0].mxu0 %v313
        %v471 = vpop.f32.mrb[0].mxu0
        %v472 = vadd.f32 0.0, %v471
        %v473 = vpop.f32.mrb[0].mxu0
        %474 = vdwg.mxu0
        %v475 = vadd.f32 %v282, %v397
        %v476 = vadd.f32 %v283, %v402
        %v477 = vadd.f32 %v284, %v407
        %v478 = vadd.f32 %v285, %v412
        %v479 = vadd.f32 %v286, %v417
        %v480 = vadd.f32 %v287, %v422
        %v481 = vadd.f32 %v288, %v427
        %v482 = vadd.f32 %v289, %v432
        %v483 = vadd.f32 %v290, %v437
        %v484 = vadd.f32 %v291, %v442
        %v485 = vadd.f32 %v292, %v447
        %v486 = vadd.f32 %v293, %v452
        %v487 = vadd.f32 %v294, %v457
        %v488 = vadd.f32 %v295, %v462
        %v489 = vadd.f32 %v296, %v467
        %v490 = vadd.f32 %v297, %v472
        %491 = vst [vmem:[#allocation2] sm:$0xff] %v475
        %492 = vst [vmem:[#allocation2 + $0x8] sm:$0xff] %v476
        %493 = vst [vmem:[#allocation2 + $0x10] sm:$0xff] %v477
        %494 = vst [vmem:[#allocation2 + $0x18] sm:$0xff] %v478
        %495 = vst [vmem:[#allocation2 + $0x20] sm:$0xff] %v479
        %496 = vst [vmem:[#allocation2 + $0x28] sm:$0xff] %v480
        %497 = vst [vmem:[#allocation2 + $0x30] sm:$0xff] %v481
        %498 = vst [vmem:[#allocation2 + $0x38] sm:$0xff] %v482
        %499 = vst [vmem:[#allocation2 + $0x40] sm:$0xff] %v483
        %500 = vst [vmem:[#allocation2 + $0x48] sm:$0xff] %v484
        %501 = vst [vmem:[#allocation2 + $0x50] sm:$0xff] %v485
        %502 = vst [vmem:[#allocation2 + $0x58] sm:$0xff] %v486
        %503 = vst [vmem:[#allocation2 + $0x60] sm:$0xff] %v487
        %504 = vst [vmem:[#allocation2 + $0x68] sm:$0xff] %v488
        %505 = vst [vmem:[#allocation2 + $0x70] sm:$0xff] %v489
        %506 = vst [vmem:[#allocation2 + $0x78] sm:$0xff] %v490
        %p507 = scmp.eq.s32.totalorder %s28, 1
        // Predicated region
        $region49: #{tpu_custom_call.1} parent=31 // pred_check
          %p508 = pneg %p507
        $region50: #{tpu_custom_call.1} parent=31 // pred_check_branch
          %510 = sbr.rel (%p508) target = $region52
        $region51: #{tpu_custom_call.1} parent=31 // pred_region
          %v511 = vld [vmem:[#allocation2] sm:$0xff]
          %v512 = vld [vmem:[#allocation2 + $0x8] sm:$0xff]
          %v513 = vld [vmem:[#allocation2 + $0x10] sm:$0xff]
          %v514 = vld [vmem:[#allocation2 + $0x18] sm:$0xff]
          %v515 = vld [vmem:[#allocation2 + $0x20] sm:$0xff]
          %v516 = vld [vmem:[#allocation2 + $0x28] sm:$0xff]
          %v517 = vld [vmem:[#allocation2 + $0x30] sm:$0xff]
          %v518 = vld [vmem:[#allocation2 + $0x38] sm:$0xff]
          %v519 = vld [vmem:[#allocation2 + $0x40] sm:$0xff]
          %v520 = vld [vmem:[#allocation2 + $0x48] sm:$0xff]
          %v521 = vld [vmem:[#allocation2 + $0x50] sm:$0xff]
          %v522 = vld [vmem:[#allocation2 + $0x58] sm:$0xff]
          %v523 = vld [vmem:[#allocation2 + $0x60] sm:$0xff]
          %v524 = vld [vmem:[#allocation2 + $0x68] sm:$0xff]
          %v525 = vld [vmem:[#allocation2 + $0x70] sm:$0xff]
          %v526 = vld [vmem:[#allocation2 + $0x78] sm:$0xff]
          %v527 = vld [vmem:[#allocation8] sm:$0xff]
          %v528 = vld [vmem:[#allocation8 + $0x8] sm:$0xff]
          %v529 = vld [vmem:[#allocation8 + $0x10] sm:$0xff]
          %v530 = vld [vmem:[#allocation8 + $0x18] sm:$0xff]
          %v531 = vld [vmem:[#allocation8 + $0x20] sm:$0xff]
          %v532 = vld [vmem:[#allocation8 + $0x28] sm:$0xff]
          %v533 = vld [vmem:[#allocation8 + $0x30] sm:$0xff]
          %v534 = vld [vmem:[#allocation8 + $0x38] sm:$0xff]
          %v535 = vld [vmem:[#allocation8 + $0x40] sm:$0xff]
          %v536 = vld [vmem:[#allocation8 + $0x48] sm:$0xff]
          %v537 = vld [vmem:[#allocation8 + $0x50] sm:$0xff]
          %v538 = vld [vmem:[#allocation8 + $0x58] sm:$0xff]
          %v539 = vld [vmem:[#allocation8 + $0x60] sm:$0xff]
          %v540 = vld [vmem:[#allocation8 + $0x68] sm:$0xff]
          %v541 = vld [vmem:[#allocation8 + $0x70] sm:$0xff]
          %v542 = vld [vmem:[#allocation8 + $0x78] sm:$0xff]
          %543 = vmatprep.subr.mxu0 0.0
          %544 = vmatpush1.msra.mxu0 %v527
          %545 = vmatprep.subr.mxu0 0.0
          %546 = vmatpush1.msra.mxu0 %v528
          %547 = vmatprep.subr.mxu0 0.0
          %548 = vmatpush1.msra.mxu0 %v529
          %549 = vmatprep.subr.mxu0 0.0
          %550 = vmatpush1.msra.mxu0 %v530
          %551 = vmatprep.subr.mxu0 0.0
          %552 = vmatpush1.msra.mxu0 %v531
          %553 = vmatprep.subr.mxu0 0.0
          %554 = vmatpush1.msra.mxu0 %v532
          %555 = vmatprep.subr.mxu0 0.0
          %556 = vmatpush1.msra.mxu0 %v533
          %557 = vmatprep.subr.mxu0 0.0
          %558 = vmatpush1.msra.mxu0 %v534
          %559 = vmatprep.subr.mxu0 0.0
          %560 = vmatpush1.msra.mxu0 %v535
          %561 = vmatprep.subr.mxu0 0.0
          %562 = vmatpush1.msra.mxu0 %v536
          %563 = vmatprep.subr.mxu0 0.0
          %564 = vmatpush1.msra.mxu0 %v537
          %565 = vmatprep.subr.mxu0 0.0
          %566 = vmatpush1.msra.mxu0 %v538
          %567 = vmatprep.subr.mxu0 0.0
          %568 = vmatpush1.msra.mxu0 %v539
          %569 = vmatprep.subr.mxu0 0.0
          %570 = vmatpush1.msra.mxu0 %v540
          %571 = vmatprep.subr.mxu0 0.0
          %572 = vmatpush1.msra.mxu0 %v541
          %573 = vmatprep.subr.mxu0 0.0
          %574 = vmatpush1.msra.mxu0 %v542
          %575 = vmatprep.subr.mxu0 0.0
          %576 = vmatpush1.msra.mxu0 0.0
          %577 = vmatprep.subr.mxu0 0.0
          %578 = vmatpush1.msra.mxu0 0.0
          %579 = vmatprep.subr.mxu0 0.0
          %580 = vmatpush1.msra.mxu0 0.0
          %581 = vmatprep.subr.mxu0 0.0
          %582 = vmatpush1.msra.mxu0 0.0
          %583 = vmatprep.subr.mxu0 0.0
          %584 = vmatpush1.msra.mxu0 0.0
          %585 = vmatprep.subr.mxu0 0.0
          %586 = vmatpush1.msra.mxu0 0.0
          %587 = vmatprep.subr.mxu0 0.0
          %588 = vmatpush1.msra.mxu0 0.0
          %589 = vmatprep.subr.mxu0 0.0
          %590 = vmatpush1.msra.mxu0 0.0
          %591 = vmatprep.subr.mxu0 0.0
          %592 = vmatpush1.msra.mxu0 0.0
          %593 = vmatprep.subr.mxu0 0.0
          %594 = vmatpush1.msra.mxu0 0.0
          %595 = vmatprep.subr.mxu0 0.0
          %596 = vmatpush1.msra.mxu0 0.0
          %597 = vmatprep.subr.mxu0 0.0
          %598 = vmatpush1.msra.mxu0 0.0
          %599 = vmatprep.subr.mxu0 0.0
          %600 = vmatpush1.msra.mxu0 0.0
          %601 = vmatprep.subr.mxu0 0.0
          %602 = vmatpush1.msra.mxu0 0.0
          %603 = vmatprep.subr.mxu0 0.0
          %604 = vmatpush1.msra.mxu0 0.0
          %605 = vmatprep.subr.mxu0 0.0
          %606 = vmatpush1.msra.mxu0 0.0
          %607 = vmatprep.mubr.f32.mxu0 0.0
          %608 = vmatmul.mubr.f32.gmra.mrb[0].mxu0 %v511
          %v609 = vpop.f32.mrb[0].mxu0
          %v610 = vadd.f32 0.0, %v609
          %v611 = vpop.f32.mrb[0].mxu0
          %612 = vmatprep.mubr.f32.mxu0 0.0
          %613 = vmatmul.mubr.f32.gmra.mrb[0].mxu0 %v512
          %v614 = vpop.f32.mrb[0].mxu0
          %v615 = vadd.f32 0.0, %v614
          %v616 = vpop.f32.mrb[0].mxu0
          %617 = vmatprep.mubr.f32.mxu0 0.0
          %618 = vmatmul.mubr.f32.gmra.mrb[0].mxu0 %v513
          %v619 = vpop.f32.mrb[0].mxu0
          %v620 = vadd.f32 0.0, %v619
          %v621 = vpop.f32.mrb[0].mxu0
          %622 = vmatprep.mubr.f32.mxu0 0.0
          %623 = vmatmul.mubr.f32.gmra.mrb[0].mxu0 %v514
          %v624 = vpop.f32.mrb[0].mxu0
          %v625 = vadd.f32 0.0, %v624
          %v626 = vpop.f32.mrb[0].mxu0
          %627 = vmatprep.mubr.f32.mxu0 0.0
          %628 = vmatmul.mubr.f32.gmra.mrb[0].mxu0 %v515
          %v629 = vpop.f32.mrb[0].mxu0
          %v630 = vadd.f32 0.0, %v629
          %v631 = vpop.f32.mrb[0].mxu0
          %632 = vmatprep.mubr.f32.mxu0 0.0
          %633 = vmatmul.mubr.f32.gmra.mrb[0].mxu0 %v516
          %v634 = vpop.f32.mrb[0].mxu0
          %v635 = vadd.f32 0.0, %v634
          %v636 = vpop.f32.mrb[0].mxu0
          %637 = vmatprep.mubr.f32.mxu0 0.0
          %638 = vmatmul.mubr.f32.gmra.mrb[0].mxu0 %v517
          %v639 = vpop.f32.mrb[0].mxu0
          %v640 = vadd.f32 0.0, %v639
          %v641 = vpop.f32.mrb[0].mxu0
          %642 = vmatprep.mubr.f32.mxu0 0.0
          %643 = vmatmul.mubr.f32.gmra.mrb[0].mxu0 %v518
          %v644 = vpop.f32.mrb[0].mxu0
          %v645 = vadd.f32 0.0, %v644
          %v646 = vpop.f32.mrb[0].mxu0
          %647 = vmatprep.mubr.f32.mxu0 0.0
          %648 = vmatmul.mubr.f32.gmra.mrb[0].mxu0 %v519
          %v649 = vpop.f32.mrb[0].mxu0
          %v650 = vadd.f32 0.0, %v649
          %v651 = vpop.f32.mrb[0].mxu0
          %652 = vmatprep.mubr.f32.mxu0 0.0
          %653 = vmatmul.mubr.f32.gmra.mrb[0].mxu0 %v520
          %v654 = vpop.f32.mrb[0].mxu0
          %v655 = vadd.f32 0.0, %v654
          %v656 = vpop.f32.mrb[0].mxu0
          %657 = vmatprep.mubr.f32.mxu0 0.0
          %658 = vmatmul.mubr.f32.gmra.mrb[0].mxu0 %v521
          %v659 = vpop.f32.mrb[0].mxu0
          %v660 = vadd.f32 0.0, %v659
          %v661 = vpop.f32.mrb[0].mxu0
          %662 = vmatprep.mubr.f32.mxu0 0.0
          %663 = vmatmul.mubr.f32.gmra.mrb[0].mxu0 %v522
          %v664 = vpop.f32.mrb[0].mxu0
          %v665 = vadd.f32 0.0, %v664
          %v666 = vpop.f32.mrb[0].mxu0
          %667 = vmatprep.mubr.f32.mxu0 0.0
          %668 = vmatmul.mubr.f32.gmra.mrb[0].mxu0 %v523
          %v669 = vpop.f32.mrb[0].mxu0
          %v670 = vadd.f32 0.0, %v669
          %v671 = vpop.f32.mrb[0].mxu0
          %672 = vmatprep.mubr.f32.mxu0 0.0
          %673 = vmatmul.mubr.f32.gmra.mrb[0].mxu0 %v524
          %v674 = vpop.f32.mrb[0].mxu0
          %v675 = vadd.f32 0.0, %v674
          %v676 = vpop.f32.mrb[0].mxu0
          %677 = vmatprep.mubr.f32.mxu0 0.0
          %678 = vmatmul.mubr.f32.gmra.mrb[0].mxu0 %v525
          %v679 = vpop.f32.mrb[0].mxu0
          %v680 = vadd.f32 0.0, %v679
          %v681 = vpop.f32.mrb[0].mxu0
          %682 = vmatprep.mubr.f32.mxu0 0.0
          %683 = vmatmul.mubr.f32.gmra.mrb[0].mxu0 %v526
          %v684 = vpop.f32.mrb[0].mxu0
          %v685 = vadd.f32 0.0, %v684
          %v686 = vpop.f32.mrb[0].mxu0
          %687 = vdwg.mxu0
          %vm688 = vcmp.ge.f32.partialorder %v610, 0.0
          %vm689 = vcmp.ge.f32.partialorder %v615, 0.0
          %vm690 = vcmp.ge.f32.partialorder %v620, 0.0
          %vm691 = vcmp.ge.f32.partialorder %v625, 0.0
          %vm692 = vcmp.ge.f32.partialorder %v630, 0.0
          %vm693 = vcmp.ge.f32.partialorder %v635, 0.0
          %vm694 = vcmp.ge.f32.partialorder %v640, 0.0
          %vm695 = vcmp.ge.f32.partialorder %v645, 0.0
          %vm696 = vcmp.ge.f32.partialorder %v650, 0.0
          %vm697 = vcmp.ge.f32.partialorder %v655, 0.0
          %vm698 = vcmp.ge.f32.partialorder %v660, 0.0
          %vm699 = vcmp.ge.f32.partialorder %v665, 0.0
          %vm700 = vcmp.ge.f32.partialorder %v670, 0.0
          %vm701 = vcmp.ge.f32.partialorder %v675, 0.0
          %vm702 = vcmp.ge.f32.partialorder %v680, 0.0
          %vm703 = vcmp.ge.f32.partialorder %v685, 0.0
          %v704 = vmul.f32 %v610, 0.2
          %v705 = vmul.f32 %v615, 0.2
          %v706 = vmul.f32 %v620, 0.2
          %v707 = vmul.f32 %v625, 0.2
          %v708 = vmul.f32 %v630, 0.2
          %v709 = vmul.f32 %v635, 0.2
          %v710 = vmul.f32 %v640, 0.2
          %v711 = vmul.f32 %v645, 0.2
          %v712 = vmul.f32 %v650, 0.2
          %v713 = vmul.f32 %v655, 0.2
          %v714 = vmul.f32 %v660, 0.2
          %v715 = vmul.f32 %v665, 0.2
          %v716 = vmul.f32 %v670, 0.2
          %v717 = vmul.f32 %v675, 0.2
          %v718 = vmul.f32 %v680, 0.2
          %v719 = vmul.f32 %v685, 0.2
          %v720 = vsel %vm688, %v610, %v704
          %v721 = vsel %vm689, %v615, %v705
          %v722 = vsel %vm690, %v620, %v706
          %v723 = vsel %vm691, %v625, %v707
          %v724 = vsel %vm692, %v630, %v708
          %v725 = vsel %vm693, %v635, %v709
          %v726 = vsel %vm694, %v640, %v710
          %v727 = vsel %vm695, %v645, %v711
          %v728 = vsel %vm696, %v650, %v712
          %v729 = vsel %vm697, %v655, %v713
          %v730 = vsel %vm698, %v660, %v714
          %v731 = vsel %vm699, %v665, %v715
          %v732 = vsel %vm700, %v670, %v716
          %v733 = vsel %vm701, %v675, %v717
          %v734 = vsel %vm702, %v680, %v718
          %v735 = vsel %vm703, %v685, %v719
          %736 = vst [vmem:[%s258] sm:$0xff] %v720
          %737 = vst [vmem:[%s258 + $0x8] sm:$0xff] %v721
          %738 = vst [vmem:[%s258 + $0x10] sm:$0xff] %v722
          %739 = vst [vmem:[%s258 + $0x18] sm:$0xff] %v723
          %740 = vst [vmem:[%s258 + $0x20] sm:$0xff] %v724
          %741 = vst [vmem:[%s258 + $0x28] sm:$0xff] %v725
          %742 = vst [vmem:[%s258 + $0x30] sm:$0xff] %v726
          %743 = vst [vmem:[%s258 + $0x38] sm:$0xff] %v727
          %744 = vst [vmem:[%s258 + $0x40] sm:$0xff] %v728
          %745 = vst [vmem:[%s258 + $0x48] sm:$0xff] %v729
          %746 = vst [vmem:[%s258 + $0x50] sm:$0xff] %v730
          %747 = vst [vmem:[%s258 + $0x58] sm:$0xff] %v731
          %748 = vst [vmem:[%s258 + $0x60] sm:$0xff] %v732
          %749 = vst [vmem:[%s258 + $0x68] sm:$0xff] %v733
          %750 = vst [vmem:[%s258 + $0x70] sm:$0xff] %v734
          %751 = vst [vmem:[%s258 + $0x78] sm:$0xff] %v735
        $region52: #{tpu_custom_call.1} parent=31 // pred_fallthru
          _
        %s752 = sand.u32 %s118, 1
        %s753 = scalar_lea.sflag [#allocation5], %s752
        %s754 = sand.u32 %s118, 1
        %s755 = smul.addr %s754, 128
        %s756 = scalar_lea.vmem [#allocation9], %s755
        // Predicated region
        $region53: #{tpu_custom_call.1} parent=31 // pred_check
          %p757 = pneg %p128
        $region54: #{tpu_custom_call.1} parent=31 // pred_check_branch
          %759 = sbr.rel (%p757) target = $region56
        $region55: #{tpu_custom_call.1} parent=31 // pred_region
          %s760 = smul.u32 16, %s27
          %s762 = ssub.s32 2048, 2048
          %763 = vsyncadd %s753, %s762
          %s764 = smul.addr %s760, 128
          %s765 = scalar_lea.hbm %s3, %s764
          %s766 = sshll.u32 %s756, 4
          %s767 = int_to_ptr.vmem [resolvable:$true] %s766
          %772 = dma.vmem_to_hbm [thread:$0]  %s767, 2048, %s765, %s753, 128, 128, 8
        $region56: #{tpu_custom_call.1} parent=31 // pred_fallthru
          _
      $region32: #{tpu_custom_call.1} parent=5 // pred_fallthru
        _
      %p773 = scmp.le.s32.totalorder 2, %s18
      // Predicated region
      $region57: #{tpu_custom_call.1} parent=5 // pred_check
        %p774 = pneg %p773
      $region58: #{tpu_custom_call.1} parent=5 // pred_check_branch
        %776 = sbr.rel (%p774) target = $region60
      $region59: #{tpu_custom_call.1} parent=5 // pred_region
        %s777 = ssub.s32 %s18, 2
        // Predicated region
        $region61: #{tpu_custom_call.1} parent=59 // pred_check
          %p778 = pneg %p134
        $region62: #{tpu_custom_call.1} parent=59 // pred_check_branch
          %780 = sbr.rel (%p778) target = $region64
        $region63: #{tpu_custom_call.1} parent=59 // pred_region
          %s781 = sand.u32 %s119, 1
          %s782 = scalar_lea.sflag [#allocation5], %s781
          %s783 = sand.u32 %s119, 1
          %s784 = smul.addr %s783, 128
          %s785 = scalar_lea.vmem [#allocation9], %s784
          %786 = dma.done %s782, 2048
        $region64: #{tpu_custom_call.1} parent=59 // pred_fallthru
          _
      $region60: #{tpu_custom_call.1} parent=5 // pred_fallthru
        _
    $region6: #{tpu_custom_call.1} parent=1 // loop_footer
      %s22 = sadd.s32 1, %s18
    $region7: #{tpu_custom_call.1} parent=1 // loop_footer_branch
      %17 = sbr.rel target = $region3
    $region8: #{tpu_custom_call.1} parent=1 // loop_exit
      _
    %787 = vsyncpa [#allocation4], 1
    %s788 = scalar_lea.sflag [#allocation4], 1
    %789 = vsyncpa %s788, 1
    %790 = vsyncpa [#allocation7], 1
    %s791 = scalar_lea.sflag [#allocation7], 1
    %792 = vsyncpa %s791, 1
    %793 = vsyncpa [#allocation5], 1
    %s794 = scalar_lea.sflag [#allocation5], 1
    %795 = vsyncpa %s794, 1

</llo_original>
